<compile_context>
chip_gen: v7x
topology: tpu7x:2x2x1
jax: 0.10.0
libtpu: 0.0.40
codegen_flags: <defaults>
</compile_context>

<pallas_src>
import math
import functools
import jax
import jax.numpy as jnp
from jax import lax
from jax.experimental import pallas as pl
from jax.experimental.pallas import tpu as pltpu


def _round_up(x, m):
    return ((x + m - 1) // m) * m


def _pick_tile(dim, align, candidates):
    """Pick (tile, padded_dim).

    Small dims get a single exact-fit tile (minimal padding).  Large dims
    prefer the biggest candidate tile (higher arithmetic intensity, fewer grid
    steps) unless a smaller tile avoids a significant (> dim/8) amount of
    padding waste.
    """
    padded_min = _round_up(dim, align)
    if padded_min <= max(candidates):
        return padded_min, padded_min
    best_t, best_p = None, None
    for t in candidates:  # ascending
        if t % align:
            continue
        p = _round_up(dim, t)
        if best_t is None or p <= best_p or (p - dim) <= dim // 8:
            best_t, best_p = t, p
    return best_t, best_p


def _fc_kernel(x_ref, w_ref, b_ref, o_ref):
    # x_ref: (tm, tk)  compute-dtype activations
    # w_ref: (tk, tn)  compute-dtype weight, pre-transposed -> MXU-native [K,N]
    # b_ref: (1,  tn)  f32 bias broadcast row
    # o_ref: (tm, tn)  f32 output tile, resident across the K grid axis
    k = pl.program_id(2)

    # Initialize the resident output tile with the bias (no scratch, no
    # separate epilogue add).
    @pl.when(k == 0)
    def _():
        o_ref[...] = jnp.broadcast_to(b_ref[...], o_ref.shape)

    # o_tile += x_tile @ w_tile on the MXU, accumulating in f32.
    o_ref[...] += jnp.dot(x_ref[...], w_ref[...],
                          preferred_element_type=jnp.float32)


@functools.partial(jax.jit, static_argnames=("compute_dtype",))
def fc_forward(x, weight, bias, *, compute_dtype=jnp.bfloat16):
    """y = x @ weight.T + bias  (torch.nn.Linear semantics).

    x:      (B, in_ch)       float32
    weight: (out_ch, in_ch)  float32  (PyTorch convention)
    bias:   (out_ch,)        float32
    compute_dtype: dtype of the MXU operands (bf16 default, f32 for strict).
    returns (B, out_ch)      float32
    """
    B, in_ch = x.shape
    out_ch = weight.shape[0]

    cdt = jnp.dtype(compute_dtype)
    is_bf16 = (cdt == jnp.dtype(jnp.bfloat16))
    sublane = 16 if is_bf16 else 8  # bf16 packs 2 rows per sublane

    # ---- tile selection (minimize padding, prefer large tiles) ------------
    tm, Mp = _pick_tile(B, sublane, (128, 256, 512))
    tn, Np = _pick_tile(out_ch, 128, (128, 256, 512))
    tk, Kp = _pick_tile(in_ch, 128, (256, 512, 1024))

    # v7x megacore: guarantee >= 2 parallel (i, j) output tiles when the shape
    # allows, so both TensorCores get work (no effect on single-TC v5e/v6e).
    if (Mp // tm) * (Np // tn) == 1:
        if tn >= 256 and tn % 256 == 0:
            tn //= 2
        elif tm >= 2 * sublane and tm % (2 * sublane) == 0:
            tm //= 2

    # ---- pad to tileable, lane-aligned shapes (plain JAX glue) ------------
    xp = x
    if (Mp, Kp) != (B, in_ch):
        xp = jnp.pad(xp, ((0, Mp - B), (0, Kp - in_ch)))
    # Pre-transpose the weight once (amortized per layer): MXU-native RHS.
    wt = weight.T  # (in_ch, out_ch)
    if (Kp, Np) != (in_ch, out_ch):
        wt = jnp.pad(wt, ((0, Kp - in_ch), (0, Np - out_ch)))
    bp = bias if Np == out_ch else jnp.pad(bias, (0, Np - out_ch))
    b2d = bp.astype(jnp.float32).reshape(1, Np)

    xp = xp.astype(cdt)
    wt = wt.astype(cdt)

    grid = (Mp // tm, Np // tn, Kp // tk)
    grid_m, grid_n, grid_k = grid

    # Truthful cost estimate: x re-streamed grid_n times, weight grid_m times.
    itemsize = cdt.itemsize
    flops = 2 * Mp * Np * Kp
    bytes_accessed = (itemsize * Mp * Kp * grid_n
                      + itemsize * Np * Kp * grid_m
                      + 4 * Mp * Np + 4 * Np)

    y_pad = pl.pallas_call(
        _fc_kernel,
        out_shape=jax.ShapeDtypeStruct((Mp, Np), jnp.float32),
        grid_spec=pltpu.PrefetchScalarGridSpec(
            num_scalar_prefetch=0,
            grid=grid,
            in_specs=[
                pl.BlockSpec((tm, tk), lambda i, j, k: (i, k)),   # x
                pl.BlockSpec((tk, tn), lambda i, j, k: (k, j)),   # weight.T
                pl.BlockSpec((1, tn), lambda i, j, k: (0, j)),    # bias
            ],
            out_specs=pl.BlockSpec((tm, tn), lambda i, j, k: (i, j)),
        ),
        compiler_params=pltpu.CompilerParams(
            dimension_semantics=("parallel", "parallel", "arbitrary"),
            vmem_limit_bytes=32 * 1024 * 1024),
        cost_estimate=pl.CostEstimate(
            flops=flops, transcendentals=0, bytes_accessed=bytes_accessed),
    )(xp, wt, b2d)

    # ---- slice the padding back off ----------------------------------------
    y = y_pad
    if (Mp, Np) != (B, out_ch):
        y = y[:B, :out_ch]
    return y.astype(x.dtype)


def init_fc_params(key, in_ch, out_ch):
    """Deterministic init mirroring torch.nn.Linear defaults."""
    kw, kb = jax.random.split(key)
    bound = 1.0 / math.sqrt(in_ch)
    weight = jax.random.uniform(kw, (out_ch, in_ch), jnp.float32, -bound, bound)
    bias = jax.random.uniform(kb, (out_ch,), jnp.float32, -bound, bound)
    return weight, bias


if __name__ == "__main__":
    in_ch, out_ch, batch = 32, 16, 8

    key = jax.random.PRNGKey(0)
    kx, kp = jax.random.split(key)
    x = jax.random.normal(kx, (batch, in_ch), jnp.float32)
    weight, bias = init_fc_params(kp, in_ch, out_ch)

    # Reference: torch Linear semantics, x @ W^T + b.
    y_ref = x @ weight.T + bias

    # Default fast path: bf16 MXU operands, f32 accumulation.
    y_bf16 = fc_forward(x, weight, bias)
    jax.block_until_ready(y_bf16)
    assert y_bf16.shape == (batch, out_ch)
    assert jnp.allclose(y_bf16, y_ref, atol=5e-2, rtol=5e-2)

    # Strict f32 validation path.
    y_f32 = fc_forward(x, weight, bias, compute_dtype=jnp.float32)
    jax.block_until_ready(y_f32)
    assert y_f32.shape == (batch, out_ch)
    assert jnp.allclose(y_f32, y_ref, atol=1e-5, rtol=1e-5)

    print("KERNEL_OK")
</pallas_src>

<mosaic_0001>
module attributes {stable_mosaic.version = 11 : i64} {
  func.func @_fc_kernel(%arg0: i32, %arg1: i32, %arg2: i32, %arg3: memref<16x128xbf16, #tpu.memory_space<vmem>>, %arg4: memref<128x128xbf16, #tpu.memory_space<vmem>>, %arg5: memref<1x128xf32, #tpu.memory_space<vmem>>, %arg6: memref<16x128xf32, #tpu.memory_space<vmem>>) attributes {dimension_semantics = [#tpu.dimension_semantics<parallel>, #tpu.dimension_semantics<parallel>, #tpu.dimension_semantics<arbitrary>], iteration_bounds = array<i64: 1, 1, 1>, scalar_prefetch = 0 : i64, scratch_operands = 0 : i64, tpu.core_type = #tpu.core_type<tc>, window_params = [{transform_indices = @transform_0, window_bounds = array<i64: 16, 128>}, {transform_indices = @transform_1, window_bounds = array<i64: 128, 128>}, {transform_indices = @transform_2, window_bounds = array<i64: 1, 128>}, {transform_indices = @transform_3, window_bounds = array<i64: 16, 128>}]} {
    %c0_i32 = arith.constant 0 : i32
    %0 = arith.cmpi eq, %arg2, %c0_i32 : i32
    %1 = arith.extui %0 : i1 to i32
    %c0_i32_0 = arith.constant 0 : i32
    %2 = arith.cmpi ne, %1, %c0_i32_0 : i32
    scf.if %2 {
      %c0_8 = arith.constant 0 : index
      %c0_9 = arith.constant 0 : index
      %9 = vector.load %arg5[%c0_8, %c0_9] : memref<1x128xf32, #tpu.memory_space<vmem>>, vector<1x128xf32>
      %10 = vector.shape_cast %9 : vector<1x128xf32> to vector<1x128xf32>
      %11 = vector.broadcast %10 : vector<1x128xf32> to vector<16x128xf32>
      %c0_10 = arith.constant 0 : index
      %c0_11 = arith.constant 0 : index
      %12 = vector.load %arg6[%c0_10, %c0_11] : memref<16x128xf32, #tpu.memory_space<vmem>>, vector<16x128xf32>
      tpu.vector_store %arg6[%c0_10, %c0_11], %11 {strides = array<i32>} : memref<16x128xf32, #tpu.memory_space<vmem>>, vector<16x128xf32>,
    } else {
    }
    %c0 = arith.constant 0 : index
    %c0_1 = arith.constant 0 : index
    %3 = vector.load %arg6[%c0, %c0_1] : memref<16x128xf32, #tpu.memory_space<vmem>>, vector<16x128xf32>
    %c0_2 = arith.constant 0 : index
    %c0_3 = arith.constant 0 : index
    %4 = vector.load %arg3[%c0_2, %c0_3] : memref<16x128xbf16, #tpu.memory_space<vmem>>, vector<16x128xbf16>
    %c0_4 = arith.constant 0 : index
    %c0_5 = arith.constant 0 : index
    %5 = vector.load %arg4[%c0_4, %c0_5] : memref<128x128xbf16, #tpu.memory_space<vmem>>, vector<128x128xbf16>
    %cst = arith.constant dense<0.000000e+00> : vector<16x128xf32>
    %6 = tpu.matmul %4, %5, %cst {dimension_numbers = #tpu.dot_dimension_numbers<[1], [0], [0], [1], [0, 0, 1, 1], [], []>} : vector<16x128xbf16>, vector<128x128xbf16>, vector<16x128xf32> -> vector<16x128xf32>
    %7 = arith.addf %3, %6 : vector<16x128xf32>
    %c0_6 = arith.constant 0 : index
    %c0_7 = arith.constant 0 : index
    %8 = vector.load %arg6[%c0_6, %c0_7] : memref<16x128xf32, #tpu.memory_space<vmem>>, vector<16x128xf32>
    tpu.vector_store %arg6[%c0_6, %c0_7], %7 {strides = array<i32>} : memref<16x128xf32, #tpu.memory_space<vmem>>, vector<16x128xf32>,
    return
  }
  func.func @transform_0(%arg0: i32, %arg1: i32, %arg2: i32) -> (i32, i32) {
    %c0_i32 = arith.constant 0 : i32
    return %arg0, %arg2 : i32, i32
  }
  func.func @transform_1(%arg0: i32, %arg1: i32, %arg2: i32) -> (i32, i32) {
    %c0_i32 = arith.constant 0 : i32
    return %arg2, %arg1 : i32, i32
  }
  func.func @transform_2(%arg0: i32, %arg1: i32, %arg2: i32) -> (i32, i32) {
    %c0_i32 = arith.constant 0 : i32
    %c0_i32_0 = arith.constant 0 : i32
    return %c0_i32, %arg1 : i32, i32
  }
  func.func @transform_3(%arg0: i32, %arg1: i32, %arg2: i32) -> (i32, i32) {
    %c0_i32 = arith.constant 0 : i32
    return %arg0, %arg1 : i32, i32
  }
}

</mosaic_0001>

<llo_original>
// kernel: fc_forward.1
$region0: #{fc_forward.1}
  #allocation0 [shape = 'u32[]', space=smem, size = 0x4, offset = 0x4, fixed_abs, tag = 'smem constant byte address 0x4 - core index']
  #allocation1 [shape = 'u32[144,128]{1,0:T(1,128)}', space=vmem, size = 0x12000, scoped, tag = 'internal scratch']
  %s0 = inlined_call_operand.vmem [shape: bf16[16,128], index: 0, kind: input, shape index: {}]
  %s1 = inlined_call_operand.vmem [shape: bf16[128,128], index: 1, kind: input, shape index: {}]
  %s2 = inlined_call_operand.vmem [shape: f32[1,128], index: 2, kind: input, shape index: {}]
  %s3 = inlined_call_operand.vmem [shape: f32[16,128], index: 3, kind: output, shape index: {}]
  %s4 = sld [smem:[#allocation0]]
  $region26: #{fc_forward.1} parent=0
    _
  %s6 = ssub.s32 1, %s4
  %s7 = scalar_select 0, %s6, %s4
  // Predicated region
  $region2: #{fc_forward.1} parent=0 // pred_check
    _
  $region3: #{fc_forward.1} parent=0 // pred_check_branch
    %9 = sbr.rel (0) target = $region5
  $region4: #{fc_forward.1} parent=0 // pred_region
    _
  $region5: #{fc_forward.1} parent=0 // pred_fallthru
    _
  // Predicated region
  $region6: #{fc_forward.1} parent=0 // pred_check
    _
  $region7: #{fc_forward.1} parent=0 // pred_check_branch
    %11 = sbr.rel (0) target = $region9
  $region8: #{fc_forward.1} parent=0 // pred_region
    _
  $region9: #{fc_forward.1} parent=0 // pred_fallthru
    _
  // Predicated region
  $region10: #{fc_forward.1} parent=0 // pred_check
    _
  $region11: #{fc_forward.1} parent=0 // pred_check_branch
    %13 = sbr.rel (0) target = $region13
  $region12: #{fc_forward.1} parent=0 // pred_region
    _
  $region13: #{fc_forward.1} parent=0 // pred_fallthru
    _
  %p15 = scmp.eq.s32.totalorder 0, 0
  // Predicated region
  $region14: #{fc_forward.1} parent=0 // pred_check
    %p16 = pneg %p15
  $region15: #{fc_forward.1} parent=0 // pred_check_branch
    %18 = sbr.rel (%p16) target = $region17
  $region16: #{fc_forward.1} parent=0 // pred_region
    %v19 = vld [vmem:[%s2] sm:$0x1]
    %v21 = vlaneseq
    %v22 = vshrl.u32 %v21, 7
    %v23 = vsub.s32 0, %v22
    %v24 = vrot.slane %v19, %v23
    %26 = vst [vmem:[%s3] sm:$0xff] %v24
    %27 = vst [vmem:[%s3 + $0x8] sm:$0xff] %v24
  $region17: #{fc_forward.1} parent=0 // pred_fallthru
    _
  %v28 = vld [vmem:[%s3] sm:$0xff]
  %v29 = vld [vmem:[%s3 + $0x8] sm:$0xff]
  %v30 = vld [vmem:[%s0] sm:$0xf]
  %v31 = vld [vmem:[%s0 + $0x4] sm:$0xf]
  %v32 = vld [vmem:[%s1] sm:$0xf]
  %v33 = vld [vmem:[%s1 + $0x4] sm:$0xf]
  %v34 = vld [vmem:[%s1 + $0x8] sm:$0xf]
  %v35 = vld [vmem:[%s1 + $0xc] sm:$0xf]
  %v36 = vld [vmem:[%s1 + $0x10] sm:$0xf]
  %v37 = vld [vmem:[%s1 + $0x14] sm:$0xf]
  %v38 = vld [vmem:[%s1 + $0x18] sm:$0xf]
  %v39 = vld [vmem:[%s1 + $0x1c] sm:$0xf]
  %v40 = vld [vmem:[%s1 + $0x20] sm:$0xf]
  %v41 = vld [vmem:[%s1 + $0x24] sm:$0xf]
  %v42 = vld [vmem:[%s1 + $0x28] sm:$0xf]
  %v43 = vld [vmem:[%s1 + $0x2c] sm:$0xf]
  %v44 = vld [vmem:[%s1 + $0x30] sm:$0xf]
  %v45 = vld [vmem:[%s1 + $0x34] sm:$0xf]
  %v46 = vld [vmem:[%s1 + $0x38] sm:$0xf]
  %v47 = vld [vmem:[%s1 + $0x3c] sm:$0xf]
  %v50 = vunpack.c.l.b16 %v30
  %v51 = vunpack.c.l.b16 %v31
  %v52 = vpack.c.b16 %v51, %v50
  %v70 = vunpack.c.l.b16 %v32
  %v71 = vunpack.c.l.b16 %v33
  %v72 = vunpack.c.l.b16 %v34
  %v73 = vunpack.c.l.b16 %v35
  %v74 = vunpack.c.l.b16 %v36
  %v75 = vunpack.c.l.b16 %v37
  %v76 = vunpack.c.l.b16 %v38
  %v77 = vunpack.c.l.b16 %v39
  %v78 = vunpack.c.l.b16 %v40
  %v79 = vunpack.c.l.b16 %v41
  %v80 = vunpack.c.l.b16 %v42
  %v81 = vunpack.c.l.b16 %v43
  %v82 = vunpack.c.l.b16 %v44
  %v83 = vunpack.c.l.b16 %v45
  %v84 = vunpack.c.l.b16 %v46
  %v85 = vunpack.c.l.b16 %v47
  %v86 = vpack.c.b16 %v71, %v70
  %v87 = vpack.c.b16 %v73, %v72
  %v88 = vpack.c.b16 %v75, %v74
  %v89 = vpack.c.b16 %v77, %v76
  %v90 = vpack.c.b16 %v79, %v78
  %v91 = vpack.c.b16 %v81, %v80
  %v92 = vpack.c.b16 %v83, %v82
  %v93 = vpack.c.b16 %v85, %v84
  %102 = vmatprep.subr.bf16.mxu0 0
  %103 = vmatpush1.bf16.msra.mxu0 %v86
  %104 = vmatprep.subr.bf16.mxu0 0
  %105 = vmatpush1.bf16.msra.mxu0 %v87
  %106 = vmatprep.subr.bf16.mxu0 0
  %107 = vmatpush1.bf16.msra.mxu0 %v88
  %108 = vmatprep.subr.bf16.mxu0 0
  %109 = vmatpush1.bf16.msra.mxu0 %v89
  %110 = vmatprep.subr.bf16.mxu0 0
  %111 = vmatpush1.bf16.msra.mxu0 %v90
  %112 = vmatprep.subr.bf16.mxu0 0
  %113 = vmatpush1.bf16.msra.mxu0 %v91
  %114 = vmatprep.subr.bf16.mxu0 0
  %115 = vmatpush1.bf16.msra.mxu0 %v92
  %116 = vmatprep.subr.bf16.mxu0 0
  %117 = vmatpush1.bf16.msra.mxu0 %v93
  %118 = vmatprep.subr.bf16.mxu0 0
  %119 = vmatpush1.bf16.msra.mxu0 0
  %120 = vmatprep.subr.bf16.mxu0 0
  %121 = vmatpush1.bf16.msra.mxu0 0
  %122 = vmatprep.subr.bf16.mxu0 0
  %123 = vmatpush1.bf16.msra.mxu0 0
  %124 = vmatprep.subr.bf16.mxu0 0
  %125 = vmatpush1.bf16.msra.mxu0 0
  %126 = vmatprep.subr.bf16.mxu0 0
  %127 = vmatpush1.bf16.msra.mxu0 0
  %128 = vmatprep.subr.bf16.mxu0 0
  %129 = vmatpush1.bf16.msra.mxu0 0
  %130 = vmatprep.subr.bf16.mxu0 0
  %131 = vmatpush1.bf16.msra.mxu0 0
  %132 = vmatprep.subr.bf16.mxu0 0
  %133 = vmatpush1.bf16.msra.mxu0 0
  %134 = vmatprep.mubr.bf16.mxu0 0
  %135 = vmatmul.mubr.bf16.gmra.mrb[0].mxu0 %v52
  %v136 = vpop.f32.mrb[0].mxu0
  %v137 = vadd.f32 0.0, %v136
  %v138 = vpop.f32.mrb[0].mxu0
  %v139 = vpop.f32.mrb[0].mxu0
  %v140 = vadd.f32 0.0, %v139
  %v141 = vpop.f32.mrb[0].mxu0
  %142 = vdwg.mxu0
  %v143 = vadd.f32 %v28, %v137
  %v144 = vadd.f32 %v29, %v140
  %145 = vst [vmem:[%s3] sm:$0xff] %v143
  %146 = vst [vmem:[%s3 + $0x8] sm:$0xff] %v144
  // Predicated region
  $region18: #{fc_forward.1} parent=0 // pred_check
    _
  $region19: #{fc_forward.1} parent=0 // pred_check_branch
    %148 = sbr.rel (0) target = $region21
  $region20: #{fc_forward.1} parent=0 // pred_region
    _
  $region21: #{fc_forward.1} parent=0 // pred_fallthru
    _
  // Predicated region
  $region22: #{fc_forward.1} parent=0 // pred_check
    _
  $region23: #{fc_forward.1} parent=0 // pred_check_branch
    %150 = sbr.rel (0) target = $region25
  $region24: #{fc_forward.1} parent=0 // pred_region
    _
  $region25: #{fc_forward.1} parent=0 // pred_fallthru
    _

</llo_original>
